<compile_context>
chip_gen: v7x
topology: tpu7x:2x2x1
jax: 0.10.0
libtpu: 0.0.40
codegen_flags: <defaults>
</compile_context>

<pallas_src>
import functools

import jax
import jax.numpy as jnp
from jax import lax
from jax.experimental import pallas as pl
from jax.experimental.pallas import tpu as pltpu


def _tvloss_kernel(ra_ref, fb_ref, out_ref, *, H, ragged):
    C, TH, W = ra_ref.shape[1], ra_ref.shape[2], ra_ref.shape[3]
    zero = jnp.float32(0.0)
    one = jnp.float32(1.0)

    # Validity masks shared across channels (2-D, (TH, W)).
    row = lax.broadcasted_iota(jnp.int32, (TH, W), 0)
    col = lax.broadcasted_iota(jnp.int32, (TH, W), 1)
    h_valid = row < (TH - 1)            # in-tile "has a next row"; the seam is added in the epilogue
    w_valid = col < (W - 1)
    if ragged:
        # Only the ragged-last-tile configuration pays for global-row masks.
        g_row = row + pl.program_id(1) * TH
        in_range = g_row < H
        h_valid = jnp.logical_and(h_valid, g_row < (H - 1))
        w_valid = jnp.logical_and(w_valid, in_range)
    else:
        in_range = None

    h_num = jnp.zeros((1, W), jnp.float32)
    h_cnt = jnp.zeros((1, W), jnp.float32)
    w_num = jnp.zeros((1, W), jnp.float32)
    w_cnt = jnp.zeros((1, W), jnp.float32)

    rgb_ra = []
    rgb_fb = []
    for c in range(C):                  # static unroll; C is small (RGB)
        ra = ra_ref[0, c].astype(jnp.float32)     # (TH, W)
        fb = fb_ref[0, c].astype(jnp.float32)
        if c < 3:
            rgb_ra.append(ra)
            rgb_fb.append(fb)

        # ---- spatial TV, height direction (next row via sublane roll) ----
        ra_dn = pltpu.roll(ra, shift=TH - 1, axis=0)   # row r <- row r+1 (last row masked)
        fb_dn = pltpu.roll(fb, shift=TH - 1, axis=0)
        h_ra = ra_dn - ra
        h_fb = fb_dn - fb
        h_cond = jnp.logical_and(h_ra * h_fb <= zero, h_valid)
        h_num += jnp.sum(jnp.where(h_cond, jnp.abs(h_fb - h_ra), zero),
                         axis=0, keepdims=True)
        h_cnt += jnp.sum(jnp.where(h_cond, one, zero), axis=0, keepdims=True)

        # ---- spatial TV, width direction (next column via lane roll) -----
        ra_rt = pltpu.roll(ra, shift=W - 1, axis=1)    # col j <- col j+1 (last col masked)
        fb_rt = pltpu.roll(fb, shift=W - 1, axis=1)
        w_ra = ra_rt - ra
        w_fb = fb_rt - fb
        w_cond = jnp.logical_and(w_ra * w_fb <= zero, w_valid)
        w_num += jnp.sum(jnp.where(w_cond, jnp.abs(w_fb - w_ra), zero),
                         axis=0, keepdims=True)
        w_cnt += jnp.sum(jnp.where(w_cond, one, zero), axis=0, keepdims=True)

    # ---- channel TV on the first three channels (R, G, B) ----------------
    ra0, ra1, ra2 = rgb_ra
    fb0, fb1, fb2 = rgb_fb
    rg_ra, rb_ra, gb_ra = ra0 - ra1, ra0 - ra2, ra1 - ra2
    rg_fb, rb_fb, gb_fb = fb0 - fb1, fb0 - fb2, fb1 - fb2

    rg_cond = rg_ra * rg_fb <= zero
    rb_cond = rb_ra * rb_fb <= zero
    # NOTE: the reference module compares gb_tv_realA with ITSELF (not fakeB);
    # reproduced exactly here.
    gb_cond = gb_ra * gb_ra <= zero
    if ragged:
        rg_cond = jnp.logical_and(rg_cond, in_range)
        rb_cond = jnp.logical_and(rb_cond, in_range)
        gb_cond = jnp.logical_and(gb_cond, in_range)

    rg_num = jnp.sum(jnp.where(rg_cond, jnp.abs(rg_fb - rg_ra), zero),
                     axis=0, keepdims=True)
    rg_cnt = jnp.sum(jnp.where(rg_cond, one, zero), axis=0, keepdims=True)
    rb_num = jnp.sum(jnp.where(rb_cond, jnp.abs(rb_fb - rb_ra), zero),
                     axis=0, keepdims=True)
    rb_cnt = jnp.sum(jnp.where(rb_cond, one, zero), axis=0, keepdims=True)
    gb_num = jnp.sum(jnp.where(gb_cond, jnp.abs(gb_fb - gb_ra), zero),
                     axis=0, keepdims=True)
    gb_cnt = jnp.sum(jnp.where(gb_cond, one, zero), axis=0, keepdims=True)

    # Lane-resident partials: 10 (1, W) rows -> one dense (16, W) store.
    rows = [h_num, h_cnt, w_num, w_cnt,
            rg_num, rg_cnt, rb_num, rb_cnt, gb_num, gb_cnt]
    pad = jnp.zeros((16 - len(rows), W), jnp.float32)
    block = jnp.concatenate(rows + [pad], axis=0)      # (16, W)
    out_ref[...] = block[None, None]


def _vmem_capacity_bytes(default=64 << 20):
    """Chip-aware physical VMEM capacity; falls back to the smallest (v7x)."""
    try:
        cap = getattr(pltpu.get_tpu_info(), "vmem_capacity_bytes", None)
        if cap:
            return int(cap)
    except Exception:
        pass
    return default


def _pick_tile_rows(H, C, W, B, itemsize, *, target_block_bytes=4 << 20,
                    min_grid_steps=4):
    """Largest H-tile (multiple of 8, or full H) under the byte budget, while
    keeping at least `min_grid_steps` grid points (v7x has 2 TensorCores)."""
    bytes_per_row = max(1, C * W * itemsize)
    budget_rows = max(8, ((target_block_bytes // bytes_per_row) // 8) * 8)

    # Feed both v7x TensorCores on small batches: aim for B * n_th >= min_grid_steps.
    if B < min_grid_steps and H % 8 == 0 and H >= 16:
        want_tiles = -(-min_grid_steps // B)                       # ceil
        cap_rows = max(8, ((-(-H // want_tiles)) // 8) * 8)        # ceil rows/tile, /8
        budget_rows = min(budget_rows, cap_rows)

    if budget_rows >= H:
        return H
    if H % 8 == 0:
        # Prefer a divisor of H: no ragged last tile -> no boundary masks.
        for th in range(budget_rows, 7, -8):
            if H % th == 0:
                return th
    return budget_rows


def tv_loss_new(x_realA, x_fakeB, *, weight_spatial=1.0, weight_channel=1.0,
                tile_rows=None):
    assert x_realA.shape == x_fakeB.shape
    B, C, H, W = x_realA.shape
    assert C >= 3, "channel TV terms need at least 3 channels (RGB)"

    itemsize = jnp.dtype(x_realA.dtype).itemsize
    if tile_rows is None:
        TH = _pick_tile_rows(H, C, W, B, itemsize)
    else:
        TH = int(tile_rows)
        assert TH == H or TH % 8 == 0, "tile_rows must be H or a multiple of 8"
    n_th = -(-H // TH)
    ragged = (H % TH) != 0

    # Chip-aware VMEM budget: double-buffered inputs (4x block) + kernel
    # temporaries, clamped under the physical capacity (64 MiB on v7x).
    block_bytes = C * TH * W * itemsize
    vmem_cap = _vmem_capacity_bytes()
    vmem_limit = int(min(vmem_cap - (8 << 20), max(32 << 20, 12 * block_bytes)))

    out_bytes = B * n_th * 16 * W * 4
    cost = pl.CostEstimate(
        flops=int(35 * B * C * H * W),
        transcendentals=0,
        bytes_accessed=int(2 * B * C * H * W * itemsize + out_bytes),
    )

    kernel = functools.partial(_tvloss_kernel, H=H, ragged=ragged)

    def tile_map(b, t):
        return (b, 0, t, 0)

    parts = pl.pallas_call(
        kernel,
        out_shape=jax.ShapeDtypeStruct((B, n_th, 16, W), jnp.float32),
        grid_spec=pltpu.PrefetchScalarGridSpec(
            num_scalar_prefetch=0,
            grid=(B, n_th),
            in_specs=[
                pl.BlockSpec((1, C, TH, W), tile_map),
                pl.BlockSpec((1, C, TH, W), tile_map),
            ],
            out_specs=pl.BlockSpec((1, 1, 16, W), lambda b, t: (b, t, 0, 0)),
        ),
        compiler_params=pltpu.CompilerParams(
            dimension_semantics=("parallel", "parallel"),
            vmem_limit_bytes=vmem_limit,
        ),
        cost_estimate=cost,
    )(x_realA, x_fakeB)

    # Epilogue 1: hierarchical reduction of the lane-resident per-tile partials.
    s = jnp.sum(parts[:, :, :10, :], axis=(0, 1, 3))          # (10,)
    h_num, h_cnt = s[0], s[1]
    w_num, w_cnt = s[2], s[3]
    rg_num, rg_cnt = s[4], s[5]
    rb_num, rb_cnt = s[6], s[7]
    gb_num, gb_cnt = s[8], s[9]

    # Epilogue 2: h-direction seam pairs that straddle two H-tiles
    # (O(B*C*(n_th-1)*W) elements; done in plain JAX instead of halo DMAs).
    if n_th > 1:
        r_hi = jnp.arange(1, n_th) * TH                       # first row of tile t; always <= H-1
        ra_hi = x_realA[:, :, r_hi, :].astype(jnp.float32)
        ra_lo = x_realA[:, :, r_hi - 1, :].astype(jnp.float32)
        fb_hi = x_fakeB[:, :, r_hi, :].astype(jnp.float32)
        fb_lo = x_fakeB[:, :, r_hi - 1, :].astype(jnp.float32)
        sh_ra = ra_hi - ra_lo
        sh_fb = fb_hi - fb_lo
        sh_cond = sh_ra * sh_fb <= 0.0
        h_num = h_num + jnp.sum(jnp.where(sh_cond, jnp.abs(sh_fb - sh_ra), 0.0))
        h_cnt = h_cnt + jnp.sum(jnp.where(sh_cond, 1.0, 0.0))

    eps = jnp.float32(1e-6)
    # torch.sum(mask + 1e-6) == sum(mask) + numel * 1e-6 for the first term of
    # each group (that is what the reference code literally does).
    n_h = jnp.float32(B * C * (H - 1) * W)
    n_ch = jnp.float32(B * H * W)
    loss_spatial = h_num / (h_cnt + n_h * eps) + w_num / (w_cnt + eps)
    loss_channel = (rg_num / (rg_cnt + n_ch * eps)
                    + rb_num / (rb_cnt + eps)
                    + gb_num / (gb_cnt + eps))
    return (loss_spatial * jnp.float32(weight_spatial)
            + loss_channel * jnp.float32(weight_channel))


def tv_loss_ref(ra, fb, weight_spatial=1.0, weight_channel=1.0):
    """Pure-JAX mirror of the PyTorch forward (for verification)."""
    diff = fb - ra
    H, W = ra.shape[2], ra.shape[3]
    h_ra = ra[:, :, 1:, :] - ra[:, :, :H - 1, :]
    w_ra = ra[:, :, :, 1:] - ra[:, :, :, :W - 1]
    h_fb = fb[:, :, 1:, :] - fb[:, :, :H - 1, :]
    w_fb = fb[:, :, :, 1:] - fb[:, :, :, :W - 1]
    h_df = diff[:, :, 1:, :] - diff[:, :, :H - 1, :]
    w_df = diff[:, :, :, 1:] - diff[:, :, :, :W - 1]
    h_mask = jnp.where(h_ra * h_fb <= 0, 1.0, 0.0)
    w_mask = jnp.where(w_ra * w_fb <= 0, 1.0, 0.0)
    loss_spatial = (jnp.sum(jnp.abs(h_df * h_mask)) / jnp.sum(h_mask + 1e-6)
                    + jnp.sum(jnp.abs(w_df * w_mask)) / (jnp.sum(w_mask) + 1e-6))

    rg_ra, rb_ra, gb_ra = (ra[:, 0] - ra[:, 1], ra[:, 0] - ra[:, 2], ra[:, 1] - ra[:, 2])
    rg_fb, rb_fb, _ = (fb[:, 0] - fb[:, 1], fb[:, 0] - fb[:, 2], fb[:, 1] - fb[:, 2])
    rg_df, rb_df, gb_df = (diff[:, 0] - diff[:, 1], diff[:, 0] - diff[:, 2],
                           diff[:, 1] - diff[:, 2])
    rg_mask = jnp.where(rg_ra * rg_fb <= 0, 1.0, 0.0)
    rb_mask = jnp.where(rb_ra * rb_fb <= 0, 1.0, 0.0)
    gb_mask = jnp.where(gb_ra * gb_ra <= 0, 1.0, 0.0)  # same self-product as torch code
    loss_channel = (jnp.sum(jnp.abs(rg_df * rg_mask)) / jnp.sum(rg_mask + 1e-6)
                    + jnp.sum(jnp.abs(rb_df * rb_mask)) / (jnp.sum(rb_mask) + 1e-6)
                    + jnp.sum(jnp.abs(gb_df * gb_mask)) / (jnp.sum(gb_mask) + 1e-6))
    return loss_spatial * weight_spatial + loss_channel * weight_channel


if __name__ == "__main__":
    key = jax.random.PRNGKey(0)
    k1, k2, k3, k4, k5, k6 = jax.random.split(key, 6)

    # module __init__ defaults: TVLoss_weight_spatial=1, TVLoss_weight_channel=1
    B, C, H, W = 2, 3, 16, 16
    x_realA = jax.random.normal(k1, (B, C, H, W), dtype=jnp.float32)
    x_fakeB = jax.random.normal(k2, (B, C, H, W), dtype=jnp.float32)

    out = tv_loss_new(x_realA, x_fakeB, weight_spatial=1.0, weight_channel=1.0)
    out = jax.block_until_ready(out)
    ref = tv_loss_ref(x_realA, x_fakeB)
    assert jnp.isfinite(out), out
    assert jnp.allclose(out, ref, rtol=1e-4, atol=1e-5), (out, ref)

    # Multi-tile (seam-in-epilogue) path, non-ragged.
    B2, C2, H2, W2 = 2, 3, 32, 16
    xa = jax.random.normal(k3, (B2, C2, H2, W2), dtype=jnp.float32)
    xb = jax.random.normal(k4, (B2, C2, H2, W2), dtype=jnp.float32)
    out2 = jax.block_until_ready(tv_loss_new(xa, xb, tile_rows=8))
    ref2 = tv_loss_ref(xa, xb)
    assert jnp.isfinite(out2), out2
    assert jnp.allclose(out2, ref2, rtol=1e-4, atol=1e-5), (out2, ref2)

    # Ragged last H-tile path (H % TH != 0 -> in-kernel boundary masks).
    B3, C3, H3, W3 = 2, 3, 40, 16
    xc = jax.random.normal(k5, (B3, C3, H3, W3), dtype=jnp.float32)
    xd = jax.random.normal(k6, (B3, C3, H3, W3), dtype=jnp.float32)
    out3 = jax.block_until_ready(tv_loss_new(xc, xd, tile_rows=16))
    ref3 = tv_loss_ref(xc, xd)
    assert jnp.isfinite(out3), out3
    assert jnp.allclose(out3, ref3, rtol=1e-4, atol=1e-5), (out3, ref3)

    print("KERNEL_OK")
</pallas_src>

<mosaic_0001>
module attributes {stable_mosaic.version = 11 : i64} {
  func.func @_tvloss_kernel(%arg0: i32, %arg1: i32, %arg2: memref<1x3x8x16xf32, #tpu.memory_space<vmem>>, %arg3: memref<1x3x8x16xf32, #tpu.memory_space<vmem>>, %arg4: memref<1x1x16x16xf32, #tpu.memory_space<vmem>>) attributes {dimension_semantics = [#tpu.dimension_semantics<parallel>, #tpu.dimension_semantics<parallel>], iteration_bounds = array<i64: 2, 2>, scalar_prefetch = 0 : i64, scratch_operands = 0 : i64, tpu.core_type = #tpu.core_type<tc>, window_params = [{transform_indices = @transform_0, window_bounds = array<i64: 1, 3, 8, 16>}, {transform_indices = @transform_1, window_bounds = array<i64: 1, 3, 8, 16>}, {transform_indices = @transform_2, window_bounds = array<i64: 1, 1, 16, 16>}]} {
    %0 = tpu.iota {dimensions = array<i32: 0>} : vector<8x16xi32>
    %1 = tpu.iota {dimensions = array<i32: 1>} : vector<8x16xi32>
    %c7_i32 = arith.constant 7 : i32
    %2 = vector.broadcast %c7_i32 : i32 to vector<8x16xi32>
    %3 = arith.cmpi slt, %0, %2 : vector<8x16xi32>
    %c15_i32 = arith.constant 15 : i32
    %4 = vector.broadcast %c15_i32 : i32 to vector<8x16xi32>
    %5 = arith.cmpi slt, %1, %4 : vector<8x16xi32>
    %cst = arith.constant 0.000000e+00 : f32
    %6 = vector.broadcast %cst : f32 to vector<1x16xf32>
    %cst_0 = arith.constant 0.000000e+00 : f32
    %7 = vector.broadcast %cst_0 : f32 to vector<1x16xf32>
    %cst_1 = arith.constant 0.000000e+00 : f32
    %8 = vector.broadcast %cst_1 : f32 to vector<1x16xf32>
    %cst_2 = arith.constant 0.000000e+00 : f32
    %9 = vector.broadcast %cst_2 : f32 to vector<1x16xf32>
    %c0 = arith.constant 0 : index
    %c0_3 = arith.constant 0 : index
    %c0_4 = arith.constant 0 : index
    %c0_5 = arith.constant 0 : index
    %10 = vector.load %arg2[%c0, %c0_3, %c0_4, %c0_5] : memref<1x3x8x16xf32, #tpu.memory_space<vmem>>, vector<1x1x8x16xf32>
    %11 = vector.shape_cast %10 : vector<1x1x8x16xf32> to vector<8x16xf32>
    %c0_6 = arith.constant 0 : index
    %c0_7 = arith.constant 0 : index
    %c0_8 = arith.constant 0 : index
    %c0_9 = arith.constant 0 : index
    %12 = vector.load %arg3[%c0_6, %c0_7, %c0_8, %c0_9] : memref<1x3x8x16xf32, #tpu.memory_space<vmem>>, vector<1x1x8x16xf32>
    %13 = vector.shape_cast %12 : vector<1x1x8x16xf32> to vector<8x16xf32>
    %c7_i32_10 = arith.constant 7 : i32
    %14 = tpu.dynamic_rotate %11 by %c7_i32_10 dim 0 : vector<8x16xf32>, i32 -> vector<8x16xf32>
    %c7_i32_11 = arith.constant 7 : i32
    %15 = tpu.dynamic_rotate %13 by %c7_i32_11 dim 0 : vector<8x16xf32>, i32 -> vector<8x16xf32>
    %16 = arith.subf %14, %11 : vector<8x16xf32>
    %17 = arith.subf %15, %13 : vector<8x16xf32>
    %18 = arith.mulf %16, %17 : vector<8x16xf32>
    %cst_12 = arith.constant 0.000000e+00 : f32
    %19 = vector.broadcast %cst_12 : f32 to vector<8x16xf32>
    %20 = arith.cmpf ole, %18, %19 : vector<8x16xf32>
    %21 = arith.andi %20, %3 : vector<8x16xi1>
    %22 = arith.subf %17, %16 : vector<8x16xf32>
    %23 = math.absf %22 : vector<8x16xf32>
    %cst_13 = arith.constant 0.000000e+00 : f32
    %24 = vector.broadcast %cst_13 : f32 to vector<8x16xf32>
    %25 = arith.select %21, %23, %24 : vector<8x16xi1>, vector<8x16xf32>
    %cst_14 = arith.constant dense<0.000000e+00> : vector<16xf32>
    %26 = vector.multi_reduction <add>, %25, %cst_14 [0] : vector<8x16xf32> to vector<16xf32>
    %27 = vector.shape_cast %26 : vector<16xf32> to vector<1x16xf32>
    %28 = arith.addf %6, %27 : vector<1x16xf32>
    %cst_15 = arith.constant 1.000000e+00 : f32
    %cst_16 = arith.constant 0.000000e+00 : f32
    %29 = vector.broadcast %cst_15 : f32 to vector<8x16xf32>
    %30 = vector.broadcast %cst_16 : f32 to vector<8x16xf32>
    %31 = arith.select %21, %29, %30 : vector<8x16xi1>, vector<8x16xf32>
    %cst_17 = arith.constant dense<0.000000e+00> : vector<16xf32>
    %32 = vector.multi_reduction <add>, %31, %cst_17 [0] : vector<8x16xf32> to vector<16xf32>
    %33 = vector.shape_cast %32 : vector<16xf32> to vector<1x16xf32>
    %34 = arith.addf %7, %33 : vector<1x16xf32>
    %c15_i32_18 = arith.constant 15 : i32
    %35 = tpu.dynamic_rotate %11 by %c15_i32_18 dim 1 : vector<8x16xf32>, i32 -> vector<8x16xf32>
    %c15_i32_19 = arith.constant 15 : i32
    %36 = tpu.dynamic_rotate %13 by %c15_i32_19 dim 1 : vector<8x16xf32>, i32 -> vector<8x16xf32>
    %37 = arith.subf %35, %11 : vector<8x16xf32>
    %38 = arith.subf %36, %13 : vector<8x16xf32>
    %39 = arith.mulf %37, %38 : vector<8x16xf32>
    %cst_20 = arith.constant 0.000000e+00 : f32
    %40 = vector.broadcast %cst_20 : f32 to vector<8x16xf32>
    %41 = arith.cmpf ole, %39, %40 : vector<8x16xf32>
    %42 = arith.andi %41, %5 : vector<8x16xi1>
    %43 = arith.subf %38, %37 : vector<8x16xf32>
    %44 = math.absf %43 : vector<8x16xf32>
    %cst_21 = arith.constant 0.000000e+00 : f32
    %45 = vector.broadcast %cst_21 : f32 to vector<8x16xf32>
    %46 = arith.select %42, %44, %45 : vector<8x16xi1>, vector<8x16xf32>
    %cst_22 = arith.constant dense<0.000000e+00> : vector<16xf32>
    %47 = vector.multi_reduction <add>, %46, %cst_22 [0] : vector<8x16xf32> to vector<16xf32>
    %48 = vector.shape_cast %47 : vector<16xf32> to vector<1x16xf32>
    %49 = arith.addf %8, %48 : vector<1x16xf32>
    %cst_23 = arith.constant 1.000000e+00 : f32
    %cst_24 = arith.constant 0.000000e+00 : f32
    %50 = vector.broadcast %cst_23 : f32 to vector<8x16xf32>
    %51 = vector.broadcast %cst_24 : f32 to vector<8x16xf32>
    %52 = arith.select %42, %50, %51 : vector<8x16xi1>, vector<8x16xf32>
    %cst_25 = arith.constant dense<0.000000e+00> : vector<16xf32>
    %53 = vector.multi_reduction <add>, %52, %cst_25 [0] : vector<8x16xf32> to vector<16xf32>
    %54 = vector.shape_cast %53 : vector<16xf32> to vector<1x16xf32>
    %55 = arith.addf %9, %54 : vector<1x16xf32>
    %c0_26 = arith.constant 0 : index
    %c1 = arith.constant 1 : index
    %c0_27 = arith.constant 0 : index
    %c0_28 = arith.constant 0 : index
    %56 = vector.load %arg2[%c0_26, %c1, %c0_27, %c0_28] : memref<1x3x8x16xf32, #tpu.memory_space<vmem>>, vector<1x1x8x16xf32>
    %57 = vector.shape_cast %56 : vector<1x1x8x16xf32> to vector<8x16xf32>
    %c0_29 = arith.constant 0 : index
    %c1_30 = arith.constant 1 : index
    %c0_31 = arith.constant 0 : index
    %c0_32 = arith.constant 0 : index
    %58 = vector.load %arg3[%c0_29, %c1_30, %c0_31, %c0_32] : memref<1x3x8x16xf32, #tpu.memory_space<vmem>>, vector<1x1x8x16xf32>
    %59 = vector.shape_cast %58 : vector<1x1x8x16xf32> to vector<8x16xf32>
    %c7_i32_33 = arith.constant 7 : i32
    %60 = tpu.dynamic_rotate %57 by %c7_i32_33 dim 0 : vector<8x16xf32>, i32 -> vector<8x16xf32>
    %c7_i32_34 = arith.constant 7 : i32
    %61 = tpu.dynamic_rotate %59 by %c7_i32_34 dim 0 : vector<8x16xf32>, i32 -> vector<8x16xf32>
    %62 = arith.subf %60, %57 : vector<8x16xf32>
    %63 = arith.subf %61, %59 : vector<8x16xf32>
    %64 = arith.mulf %62, %63 : vector<8x16xf32>
    %cst_35 = arith.constant 0.000000e+00 : f32
    %65 = vector.broadcast %cst_35 : f32 to vector<8x16xf32>
    %66 = arith.cmpf ole, %64, %65 : vector<8x16xf32>
    %67 = arith.andi %66, %3 : vector<8x16xi1>
    %68 = arith.subf %63, %62 : vector<8x16xf32>
    %69 = math.absf %68 : vector<8x16xf32>
    %cst_36 = arith.constant 0.000000e+00 : f32
    %70 = vector.broadcast %cst_36 : f32 to vector<8x16xf32>
    %71 = arith.select %67, %69, %70 : vector<8x16xi1>, vector<8x16xf32>
    %cst_37 = arith.constant dense<0.000000e+00> : vector<16xf32>
    %72 = vector.multi_reduction <add>, %71, %cst_37 [0] : vector<8x16xf32> to vector<16xf32>
    %73 = vector.shape_cast %72 : vector<16xf32> to vector<1x16xf32>
    %74 = arith.addf %28, %73 : vector<1x16xf32>
    %cst_38 = arith.constant 1.000000e+00 : f32
    %cst_39 = arith.constant 0.000000e+00 : f32
    %75 = vector.broadcast %cst_38 : f32 to vector<8x16xf32>
    %76 = vector.broadcast %cst_39 : f32 to vector<8x16xf32>
    %77 = arith.select %67, %75, %76 : vector<8x16xi1>, vector<8x16xf32>
    %cst_40 = arith.constant dense<0.000000e+00> : vector<16xf32>
    %78 = vector.multi_reduction <add>, %77, %cst_40 [0] : vector<8x16xf32> to vector<16xf32>
    %79 = vector.shape_cast %78 : vector<16xf32> to vector<1x16xf32>
    %80 = arith.addf %34, %79 : vector<1x16xf32>
    %c15_i32_41 = arith.constant 15 : i32
    %81 = tpu.dynamic_rotate %57 by %c15_i32_41 dim 1 : vector<8x16xf32>, i32 -> vector<8x16xf32>
    %c15_i32_42 = arith.constant 15 : i32
    %82 = tpu.dynamic_rotate %59 by %c15_i32_42 dim 1 : vector<8x16xf32>, i32 -> vector<8x16xf32>
    %83 = arith.subf %81, %57 : vector<8x16xf32>
    %84 = arith.subf %82, %59 : vector<8x16xf32>
    %85 = arith.mulf %83, %84 : vector<8x16xf32>
    %cst_43 = arith.constant 0.000000e+00 : f32
    %86 = vector.broadcast %cst_43 : f32 to vector<8x16xf32>
    %87 = arith.cmpf ole, %85, %86 : vector<8x16xf32>
    %88 = arith.andi %87, %5 : vector<8x16xi1>
    %89 = arith.subf %84, %83 : vector<8x16xf32>
    %90 = math.absf %89 : vector<8x16xf32>
    %cst_44 = arith.constant 0.000000e+00 : f32
    %91 = vector.broadcast %cst_44 : f32 to vector<8x16xf32>
    %92 = arith.select %88, %90, %91 : vector<8x16xi1>, vector<8x16xf32>
    %cst_45 = arith.constant dense<0.000000e+00> : vector<16xf32>
    %93 = vector.multi_reduction <add>, %92, %cst_45 [0] : vector<8x16xf32> to vector<16xf32>
    %94 = vector.shape_cast %93 : vector<16xf32> to vector<1x16xf32>
    %95 = arith.addf %49, %94 : vector<1x16xf32>
    %cst_46 = arith.constant 1.000000e+00 : f32
    %cst_47 = arith.constant 0.000000e+00 : f32
    %96 = vector.broadcast %cst_46 : f32 to vector<8x16xf32>
    %97 = vector.broadcast %cst_47 : f32 to vector<8x16xf32>
    %98 = arith.select %88, %96, %97 : vector<8x16xi1>, vector<8x16xf32>
    %cst_48 = arith.constant dense<0.000000e+00> : vector<16xf32>
    %99 = vector.multi_reduction <add>, %98, %cst_48 [0] : vector<8x16xf32> to vector<16xf32>
    %100 = vector.shape_cast %99 : vector<16xf32> to vector<1x16xf32>
    %101 = arith.addf %55, %100 : vector<1x16xf32>
    %c0_49 = arith.constant 0 : index
    %c2 = arith.constant 2 : index
    %c0_50 = arith.constant 0 : index
    %c0_51 = arith.constant 0 : index
    %102 = vector.load %arg2[%c0_49, %c2, %c0_50, %c0_51] : memref<1x3x8x16xf32, #tpu.memory_space<vmem>>, vector<1x1x8x16xf32>
    %103 = vector.shape_cast %102 : vector<1x1x8x16xf32> to vector<8x16xf32>
    %c0_52 = arith.constant 0 : index
    %c2_53 = arith.constant 2 : index
    %c0_54 = arith.constant 0 : index
    %c0_55 = arith.constant 0 : index
    %104 = vector.load %arg3[%c0_52, %c2_53, %c0_54, %c0_55] : memref<1x3x8x16xf32, #tpu.memory_space<vmem>>, vector<1x1x8x16xf32>
    %105 = vector.shape_cast %104 : vector<1x1x8x16xf32> to vector<8x16xf32>
    %c7_i32_56 = arith.constant 7 : i32
    %106 = tpu.dynamic_rotate %103 by %c7_i32_56 dim 0 : vector<8x16xf32>, i32 -> vector<8x16xf32>
    %c7_i32_57 = arith.constant 7 : i32
    %107 = tpu.dynamic_rotate %105 by %c7_i32_57 dim 0 : vector<8x16xf32>, i32 -> vector<8x16xf32>
    %108 = arith.subf %106, %103 : vector<8x16xf32>
    %109 = arith.subf %107, %105 : vector<8x16xf32>
    %110 = arith.mulf %108, %109 : vector<8x16xf32>
    %cst_58 = arith.constant 0.000000e+00 : f32
    %111 = vector.broadcast %cst_58 : f32 to vector<8x16xf32>
    %112 = arith.cmpf ole, %110, %111 : vector<8x16xf32>
    %113 = arith.andi %112, %3 : vector<8x16xi1>
    %114 = arith.subf %109, %108 : vector<8x16xf32>
    %115 = math.absf %114 : vector<8x16xf32>
    %cst_59 = arith.constant 0.000000e+00 : f32
    %116 = vector.broadcast %cst_59 : f32 to vector<8x16xf32>
    %117 = arith.select %113, %115, %116 : vector<8x16xi1>, vector<8x16xf32>
    %cst_60 = arith.constant dense<0.000000e+00> : vector<16xf32>
    %118 = vector.multi_reduction <add>, %117, %cst_60 [0] : vector<8x16xf32> to vector<16xf32>
    %119 = vector.shape_cast %118 : vector<16xf32> to vector<1x16xf32>
    %120 = arith.addf %74, %119 : vector<1x16xf32>
    %cst_61 = arith.constant 1.000000e+00 : f32
    %cst_62 = arith.constant 0.000000e+00 : f32
    %121 = vector.broadcast %cst_61 : f32 to vector<8x16xf32>
    %122 = vector.broadcast %cst_62 : f32 to vector<8x16xf32>
    %123 = arith.select %113, %121, %122 : vector<8x16xi1>, vector<8x16xf32>
    %cst_63 = arith.constant dense<0.000000e+00> : vector<16xf32>
    %124 = vector.multi_reduction <add>, %123, %cst_63 [0] : vector<8x16xf32> to vector<16xf32>
    %125 = vector.shape_cast %124 : vector<16xf32> to vector<1x16xf32>
    %126 = arith.addf %80, %125 : vector<1x16xf32>
    %c15_i32_64 = arith.constant 15 : i32
    %127 = tpu.dynamic_rotate %103 by %c15_i32_64 dim 1 : vector<8x16xf32>, i32 -> vector<8x16xf32>
    %c15_i32_65 = arith.constant 15 : i32
    %128 = tpu.dynamic_rotate %105 by %c15_i32_65 dim 1 : vector<8x16xf32>, i32 -> vector<8x16xf32>
    %129 = arith.subf %127, %103 : vector<8x16xf32>
    %130 = arith.subf %128, %105 : vector<8x16xf32>
    %131 = arith.mulf %129, %130 : vector<8x16xf32>
    %cst_66 = arith.constant 0.000000e+00 : f32
    %132 = vector.broadcast %cst_66 : f32 to vector<8x16xf32>
    %133 = arith.cmpf ole, %131, %132 : vector<8x16xf32>
    %134 = arith.andi %133, %5 : vector<8x16xi1>
    %135 = arith.subf %130, %129 : vector<8x16xf32>
    %136 = math.absf %135 : vector<8x16xf32>
    %cst_67 = arith.constant 0.000000e+00 : f32
    %137 = vector.broadcast %cst_67 : f32 to vector<8x16xf32>
    %138 = arith.select %134, %136, %137 : vector<8x16xi1>, vector<8x16xf32>
    %cst_68 = arith.constant dense<0.000000e+00> : vector<16xf32>
    %139 = vector.multi_reduction <add>, %138, %cst_68 [0] : vector<8x16xf32> to vector<16xf32>
    %140 = vector.shape_cast %139 : vector<16xf32> to vector<1x16xf32>
    %141 = arith.addf %95, %140 : vector<1x16xf32>
    %cst_69 = arith.constant 1.000000e+00 : f32
    %cst_70 = arith.constant 0.000000e+00 : f32
    %142 = vector.broadcast %cst_69 : f32 to vector<8x16xf32>
    %143 = vector.broadcast %cst_70 : f32 to vector<8x16xf32>
    %144 = arith.select %134, %142, %143 : vector<8x16xi1>, vector<8x16xf32>
    %cst_71 = arith.constant dense<0.000000e+00> : vector<16xf32>
    %145 = vector.multi_reduction <add>, %144, %cst_71 [0] : vector<8x16xf32> to vector<16xf32>
    %146 = vector.shape_cast %145 : vector<16xf32> to vector<1x16xf32>
    %147 = arith.addf %101, %146 : vector<1x16xf32>
    %148 = arith.subf %11, %57 : vector<8x16xf32>
    %149 = arith.subf %11, %103 : vector<8x16xf32>
    %150 = arith.subf %57, %103 : vector<8x16xf32>
    %151 = arith.subf %13, %59 : vector<8x16xf32>
    %152 = arith.subf %13, %105 : vector<8x16xf32>
    %153 = arith.subf %59, %105 : vector<8x16xf32>
    %154 = arith.mulf %148, %151 : vector<8x16xf32>
    %cst_72 = arith.constant 0.000000e+00 : f32
    %155 = vector.broadcast %cst_72 : f32 to vector<8x16xf32>
    %156 = arith.cmpf ole, %154, %155 : vector<8x16xf32>
    %157 = arith.mulf %149, %152 : vector<8x16xf32>
    %cst_73 = arith.constant 0.000000e+00 : f32
    %158 = vector.broadcast %cst_73 : f32 to vector<8x16xf32>
    %159 = arith.cmpf ole, %157, %158 : vector<8x16xf32>
    %160 = arith.mulf %150, %150 : vector<8x16xf32>
    %cst_74 = arith.constant 0.000000e+00 : f32
    %161 = vector.broadcast %cst_74 : f32 to vector<8x16xf32>
    %162 = arith.cmpf ole, %160, %161 : vector<8x16xf32>
    %163 = arith.subf %151, %148 : vector<8x16xf32>
    %164 = math.absf %163 : vector<8x16xf32>
    %cst_75 = arith.constant 0.000000e+00 : f32
    %165 = vector.broadcast %cst_75 : f32 to vector<8x16xf32>
    %166 = arith.select %156, %164, %165 : vector<8x16xi1>, vector<8x16xf32>
    %cst_76 = arith.constant dense<0.000000e+00> : vector<16xf32>
    %167 = vector.multi_reduction <add>, %166, %cst_76 [0] : vector<8x16xf32> to vector<16xf32>
    %168 = vector.shape_cast %167 : vector<16xf32> to vector<1x16xf32>
    %cst_77 = arith.constant 1.000000e+00 : f32
    %cst_78 = arith.constant 0.000000e+00 : f32
    %169 = vector.broadcast %cst_77 : f32 to vector<8x16xf32>
    %170 = vector.broadcast %cst_78 : f32 to vector<8x16xf32>
    %171 = arith.select %156, %169, %170 : vector<8x16xi1>, vector<8x16xf32>
    %cst_79 = arith.constant dense<0.000000e+00> : vector<16xf32>
    %172 = vector.multi_reduction <add>, %171, %cst_79 [0] : vector<8x16xf32> to vector<16xf32>
    %173 = vector.shape_cast %172 : vector<16xf32> to vector<1x16xf32>
    %174 = arith.subf %152, %149 : vector<8x16xf32>
    %175 = math.absf %174 : vector<8x16xf32>
    %cst_80 = arith.constant 0.000000e+00 : f32
    %176 = vector.broadcast %cst_80 : f32 to vector<8x16xf32>
    %177 = arith.select %159, %175, %176 : vector<8x16xi1>, vector<8x16xf32>
    %cst_81 = arith.constant dense<0.000000e+00> : vector<16xf32>
    %178 = vector.multi_reduction <add>, %177, %cst_81 [0] : vector<8x16xf32> to vector<16xf32>
    %179 = vector.shape_cast %178 : vector<16xf32> to vector<1x16xf32>
    %cst_82 = arith.constant 1.000000e+00 : f32
    %cst_83 = arith.constant 0.000000e+00 : f32
    %180 = vector.broadcast %cst_82 : f32 to vector<8x16xf32>
    %181 = vector.broadcast %cst_83 : f32 to vector<8x16xf32>
    %182 = arith.select %159, %180, %181 : vector<8x16xi1>, vector<8x16xf32>
    %cst_84 = arith.constant dense<0.000000e+00> : vector<16xf32>
    %183 = vector.multi_reduction <add>, %182, %cst_84 [0] : vector<8x16xf32> to vector<16xf32>
    %184 = vector.shape_cast %183 : vector<16xf32> to vector<1x16xf32>
    %185 = arith.subf %153, %150 : vector<8x16xf32>
    %186 = math.absf %185 : vector<8x16xf32>
    %cst_85 = arith.constant 0.000000e+00 : f32
    %187 = vector.broadcast %cst_85 : f32 to vector<8x16xf32>
    %188 = arith.select %162, %186, %187 : vector<8x16xi1>, vector<8x16xf32>
    %cst_86 = arith.constant dense<0.000000e+00> : vector<16xf32>
    %189 = vector.multi_reduction <add>, %188, %cst_86 [0] : vector<8x16xf32> to vector<16xf32>
    %190 = vector.shape_cast %189 : vector<16xf32> to vector<1x16xf32>
    %cst_87 = arith.constant 1.000000e+00 : f32
    %cst_88 = arith.constant 0.000000e+00 : f32
    %191 = vector.broadcast %cst_87 : f32 to vector<8x16xf32>
    %192 = vector.broadcast %cst_88 : f32 to vector<8x16xf32>
    %193 = arith.select %162, %191, %192 : vector<8x16xi1>, vector<8x16xf32>
    %cst_89 = arith.constant dense<0.000000e+00> : vector<16xf32>
    %194 = vector.multi_reduction <add>, %193, %cst_89 [0] : vector<8x16xf32> to vector<16xf32>
    %195 = vector.shape_cast %194 : vector<16xf32> to vector<1x16xf32>
    %cst_90 = arith.constant 0.000000e+00 : f32
    %196 = vector.broadcast %cst_90 : f32 to vector<6x16xf32>
    %197 = tpu.concatenate %120, %126, %141, %147, %168, %173, %179, %184, %190, %195, %196 in 0 : vector<1x16xf32>, vector<1x16xf32>, vector<1x16xf32>, vector<1x16xf32>, vector<1x16xf32>, vector<1x16xf32>, vector<1x16xf32>, vector<1x16xf32>, vector<1x16xf32>, vector<1x16xf32>, vector<6x16xf32> -> vector<16x16xf32>
    %198 = vector.shape_cast %197 : vector<16x16xf32> to vector<1x1x16x16xf32>
    %c0_91 = arith.constant 0 : index
    %c0_92 = arith.constant 0 : index
    %c0_93 = arith.constant 0 : index
    %c0_94 = arith.constant 0 : index
    %199 = vector.load %arg4[%c0_91, %c0_92, %c0_93, %c0_94] : memref<1x1x16x16xf32, #tpu.memory_space<vmem>>, vector<1x1x16x16xf32>
    tpu.vector_store %arg4[%c0_91, %c0_92, %c0_93, %c0_94], %198 {strides = array<i32>} : memref<1x1x16x16xf32, #tpu.memory_space<vmem>>, vector<1x1x16x16xf32>,
    return
  }
  func.func @transform_0(%arg0: i32, %arg1: i32) -> (i32, i32, i32, i32) {
    %c0_i32 = arith.constant 0 : i32
    %c0_i32_0 = arith.constant 0 : i32
    %c0_i32_1 = arith.constant 0 : i32
    return %arg0, %c0_i32, %arg1, %c0_i32_0 : i32, i32, i32, i32
  }
  func.func @transform_1(%arg0: i32, %arg1: i32) -> (i32, i32, i32, i32) {
    %c0_i32 = arith.constant 0 : i32
    %c0_i32_0 = arith.constant 0 : i32
    %c0_i32_1 = arith.constant 0 : i32
    return %arg0, %c0_i32, %arg1, %c0_i32_0 : i32, i32, i32, i32
  }
  func.func @transform_2(%arg0: i32, %arg1: i32) -> (i32, i32, i32, i32) {
    %c0_i32 = arith.constant 0 : i32
    %c0_i32_0 = arith.constant 0 : i32
    %c0_i32_1 = arith.constant 0 : i32
    return %arg0, %arg1, %c0_i32, %c0_i32_0 : i32, i32, i32, i32
  }
}

</mosaic_0001>

<llo_original>
// kernel: tpu_custom_call.1
$region0: #{tpu_custom_call.1}
  #allocation0 [shape = 'u32[]', space=smem, size = 0x4, offset = 0x4, fixed_abs, tag = 'smem constant byte address 0x4 - core index']
  #allocation1 [shape = 'u32[144,128]{1,0:T(1,128)}', space=vmem, size = 0x12000, scoped, tag = 'internal scratch']
  %s0 = inlined_call_operand.hbm [shape: f32[2,3,16,16], index: 0, kind: input, shape index: {}]
  %s1 = inlined_call_operand.hbm [shape: f32[2,3,16,16], index: 1, kind: input, shape index: {}]
  %s2 = inlined_call_operand.hbm [shape: f32[2,2,16,16], index: 2, kind: output, shape index: {}]
  %s3 = sld [smem:[#allocation0]]
  $region49: #{tpu_custom_call.1} parent=0
    _
  %s5 = ssub.s32 1, %s3
  %s6 = scalar_select 0, %s5, %s3
  $region1: #{tpu_custom_call.1} parent=0
    #allocation2 [shape = 'u8[24576]{0}', space=vmem, size = 0x6000, scoped, tag = 'input window, operand 0']
    #allocation3 [shape = 's32[2]{0}', space=sflag, size = 0x8, scoped, tag = 'scoped memory for tpu_custom_call.1']
    #allocation4 [shape = 's32[2]{0}', space=sflag, size = 0x8, scoped, tag = 'scoped memory for tpu_custom_call.1']
    #allocation5 [shape = 'u8[24576]{0}', space=vmem, size = 0x6000, scoped, tag = 'input window, operand 1']
    #allocation6 [shape = 's32[2]{0}', space=sflag, size = 0x8, scoped, tag = 'scoped memory for tpu_custom_call.1']
    #allocation7 [shape = 'u8[16384]{0}', space=vmem, size = 0x4000, scoped, tag = 'output window, operand 0']
    %7 = vsyncpa [#allocation3], 0
    %s8 = scalar_lea.sflag [#allocation3], 1
    %9 = vsyncpa %s8, 0
    %10 = vsyncpa [#allocation6], 0
    %s11 = scalar_lea.sflag [#allocation6], 1
    %12 = vsyncpa %s11, 0
    %13 = vsyncpa [#allocation4], 0
    %s14 = scalar_lea.sflag [#allocation4], 1
    %15 = vsyncpa %s14, 0
    loop: start=0, step=1, limit=6
    $region2: #{tpu_custom_call.1} parent=1 // loop_pre_header
      _
    $region3: #{tpu_custom_call.1} parent=1 // loop_header
      %s17 = sphi 0, %s21
      %p18 = scmp.ge.s32.totalorder %s17, 6
      %s24 = sphi 0, %s36
      %s25 = sphi 0, %s32
      %s26 = sphi 0, %s24
      %s27 = sphi 0, %s25
      %s28 = sphi 0, %s26
      %s29 = sphi 0, %s27
      %s41 = sphi 0, %s43
      %s44 = sphi 0, %s41
      %s45 = sphi 0, %s44
      %s61 = sphi 0, %s45
      %s69 = sphi 0, %s71
      %s72 = sphi 0, %s69
      %s73 = sphi 0, %s72
      %s89 = sphi 0, %s73
      %s97 = sphi 0, %s99
      %s100 = sphi 0, %s97
      %s101 = sphi 0, %s100
      %s117 = sphi 0, %s101
    $region4: #{tpu_custom_call.1} parent=1 // loop_header_branch
      %20 = sbr.rel (%p18) target = $region8
    $region5: #{tpu_custom_call.1} parent=1 // loop_body
      %s22 = ssub.s32 %s17, 1
      %s23 = ssub.s32 %s17, 2
      %s30 = sadd.s32 1, %s25
      %p31 = scmp.ge.s32.totalorder %s30, 2
      %s32 = scalar_select %p31, 0, %s30
      %s33 = sadd.s32 1, %s24
      %s34 = scalar_select %p31, %s33, %s24
      %p35 = scmp.ge.s32.totalorder %s34, 2
      %s36 = scalar_select %p35, 0, %s34
      %s37 = ssub.s32 %s24, %s36
      %s38 = ssub.s32 %s25, %s32
      %s39 = sor.u32 %s37, %s38
      %p40 = scmp.eq.s32.totalorder %s39, 0
      %s42 = sadd.s32 %s41, 1
      %s43 = scalar_select %p40, %s41, %s42
      %p46 = pneg %p40
      %p47 = scmp.eq.s32.totalorder %s17, 3
      %p48 = por %p46, %p47
      %p49 = scmp.ne.s32.totalorder %s41, %s44
      %p50 = scmp.eq.s32.totalorder %s17, 0
      %p51 = por %p49, %p50
      %p52 = scmp.ne.s32.totalorder %s41, %s44
      %p53 = scmp.eq.s32.totalorder %s22, 3
      %p54 = por %p52, %p53
      %p55 = scmp.ne.s32.totalorder %s44, %s45
      %p56 = scmp.eq.s32.totalorder %s22, 0
      %p57 = por %p55, %p56
      %p58 = scmp.ne.s32.totalorder %s44, %s45
      %p59 = scmp.eq.s32.totalorder %s23, 3
      %p60 = por %p58, %p59
      %p62 = scmp.ne.s32.totalorder %s45, %s61
      %p63 = scmp.eq.s32.totalorder %s23, 0
      %p64 = por %p62, %p63
      %s65 = ssub.s32 %s24, %s36
      %s66 = ssub.s32 %s25, %s32
      %s67 = sor.u32 %s65, %s66
      %p68 = scmp.eq.s32.totalorder %s67, 0
      %s70 = sadd.s32 %s69, 1
      %s71 = scalar_select %p68, %s69, %s70
      %p74 = pneg %p68
      %p75 = scmp.eq.s32.totalorder %s17, 3
      %p76 = por %p74, %p75
      %p77 = scmp.ne.s32.totalorder %s69, %s72
      %p78 = scmp.eq.s32.totalorder %s17, 0
      %p79 = por %p77, %p78
      %p80 = scmp.ne.s32.totalorder %s69, %s72
      %p81 = scmp.eq.s32.totalorder %s22, 3
      %p82 = por %p80, %p81
      %p83 = scmp.ne.s32.totalorder %s72, %s73
      %p84 = scmp.eq.s32.totalorder %s22, 0
      %p85 = por %p83, %p84
      %p86 = scmp.ne.s32.totalorder %s72, %s73
      %p87 = scmp.eq.s32.totalorder %s23, 3
      %p88 = por %p86, %p87
      %p90 = scmp.ne.s32.totalorder %s73, %s89
      %p91 = scmp.eq.s32.totalorder %s23, 0
      %p92 = por %p90, %p91
      %s93 = ssub.s32 %s24, %s36
      %s94 = ssub.s32 %s25, %s32
      %s95 = sor.u32 %s93, %s94
      %p96 = scmp.eq.s32.totalorder %s95, 0
      %s98 = sadd.s32 %s97, 1
      %s99 = scalar_select %p96, %s97, %s98
      %p102 = pneg %p96
      %p103 = scmp.eq.s32.totalorder %s17, 3
      %p104 = por %p102, %p103
      %p105 = scmp.ne.s32.totalorder %s97, %s100
      %p106 = scmp.eq.s32.totalorder %s17, 0
      %p107 = por %p105, %p106
      %p108 = scmp.ne.s32.totalorder %s97, %s100
      %p109 = scmp.eq.s32.totalorder %s22, 3
      %p110 = por %p108, %p109
      %p111 = scmp.ne.s32.totalorder %s100, %s101
      %p112 = scmp.eq.s32.totalorder %s22, 0
      %p113 = por %p111, %p112
      %p114 = scmp.ne.s32.totalorder %s100, %s101
      %p115 = scmp.eq.s32.totalorder %s23, 3
      %p116 = por %p114, %p115
      %p118 = scmp.ne.s32.totalorder %s101, %s117
      %p119 = scmp.eq.s32.totalorder %s23, 0
      %p120 = por %p118, %p119
      %p121 = scmp.le.s32.totalorder 1, %s17
      %p122 = scmp.lt.s32.totalorder %s17, 5
      %p123 = pnand %p121, %p122
      %p124 = pneg %p123
      // Predicated region
      $region9: #{tpu_custom_call.1} parent=5 // pred_check
        _
      $region10: #{tpu_custom_call.1} parent=5 // pred_check_branch
        %126 = sbr.rel (%p123) target = $region12
      $region11: #{tpu_custom_call.1} parent=5 // pred_region
        %s127 = ssub.s32 %s17, 1
      $region12: #{tpu_custom_call.1} parent=5 // pred_fallthru
        _
      %p128 = scmp.lt.s32.totalorder %s17, 4
      // Predicated region
      $region13: #{tpu_custom_call.1} parent=5 // pred_check
        %p129 = pneg %p128
      $region14: #{tpu_custom_call.1} parent=5 // pred_check_branch
        %131 = sbr.rel (%p129) target = $region16
      $region15: #{tpu_custom_call.1} parent=5 // pred_region
        // Predicated region
        $region17: #{tpu_custom_call.1} parent=15 // pred_check
          %p132 = pneg %p51
        $region18: #{tpu_custom_call.1} parent=15 // pred_check_branch
          %134 = sbr.rel (%p132) target = $region20
        $region19: #{tpu_custom_call.1} parent=15 // pred_region
          %s135 = sand.u32 %s41, 1
          %s136 = scalar_lea.sflag [#allocation3], %s135
          %s137 = sand.u32 %s41, 1
          %s138 = smul.addr %s137, 24
          %s139 = scalar_lea.vmem [#allocation2], %s138
          %s141 = ssub.s32 384, 384
          %142 = vsyncadd %s136, %s141
          %s143 = smul.addr %s24, 6
          %s144 = sadd.s32 %s25, %s143
          %s145 = smul.addr %s144, 128
          %s146 = scalar_lea.hbm %s0, %s145
          %s147 = sshll.u32 %s139, 4
          %s148 = int_to_ptr.vmem [resolvable:$true] %s147
          %153 = dma.hbm_to_vmem [thread:$0]  %s146, 384, %s148, %s136, 256, 128, 8
        $region20: #{tpu_custom_call.1} parent=15 // pred_fallthru
          _
        // Predicated region
        $region21: #{tpu_custom_call.1} parent=15 // pred_check
          %p154 = pneg %p79
        $region22: #{tpu_custom_call.1} parent=15 // pred_check_branch
          %156 = sbr.rel (%p154) target = $region24
        $region23: #{tpu_custom_call.1} parent=15 // pred_region
          %s157 = sand.u32 %s69, 1
          %s158 = scalar_lea.sflag [#allocation6], %s157
          %s159 = sand.u32 %s69, 1
          %s160 = smul.addr %s159, 24
          %s161 = scalar_lea.vmem [#allocation5], %s160
          %s163 = ssub.s32 384, 384
          %164 = vsyncadd %s158, %s163
          %s165 = smul.addr %s24, 6
          %s166 = sadd.s32 %s25, %s165
          %s167 = smul.addr %s166, 128
          %s168 = scalar_lea.hbm %s1, %s167
          %s169 = sshll.u32 %s161, 4
          %s170 = int_to_ptr.vmem [resolvable:$true] %s169
          %175 = dma.hbm_to_vmem [thread:$0]  %s168, 384, %s170, %s158, 256, 128, 8
        $region24: #{tpu_custom_call.1} parent=15 // pred_fallthru
          _
      $region16: #{tpu_custom_call.1} parent=5 // pred_fallthru
        _
      %p176 = scmp.le.s32.totalorder 1, %s17
      %p177 = scmp.lt.s32.totalorder %s17, 5
      %p178 = pnand %p176, %p177
      %p179 = pneg %p178
      // Predicated region
      $region25: #{tpu_custom_call.1} parent=5 // pred_check
        _
      $region26: #{tpu_custom_call.1} parent=5 // pred_check_branch
        %181 = sbr.rel (%p178) target = $region28
      $region27: #{tpu_custom_call.1} parent=5 // pred_region
        %s182 = ssub.s32 %s17, 1
        %s183 = sand.u32 %s44, 1
        %s184 = scalar_lea.sflag [#allocation3], %s183
        %s185 = sand.u32 %s44, 1
        %s186 = smul.addr %s185, 24
        %s187 = scalar_lea.vmem [#allocation2], %s186
        // Predicated region
        $region29: #{tpu_custom_call.1} parent=27 // pred_check
          %p188 = pneg %p57
        $region30: #{tpu_custom_call.1} parent=27 // pred_check_branch
          %190 = sbr.rel (%p188) target = $region32
        $region31: #{tpu_custom_call.1} parent=27 // pred_region
          %191 = dma.done %s184, 384
        $region32: #{tpu_custom_call.1} parent=27 // pred_fallthru
          _
        %s192 = sand.u32 %s72, 1
        %s193 = scalar_lea.sflag [#allocation6], %s192
        %s194 = sand.u32 %s72, 1
        %s195 = smul.addr %s194, 24
        %s196 = scalar_lea.vmem [#allocation5], %s195
        // Predicated region
        $region33: #{tpu_custom_call.1} parent=27 // pred_check
          %p197 = pneg %p85
        $region34: #{tpu_custom_call.1} parent=27 // pred_check_branch
          %199 = sbr.rel (%p197) target = $region36
        $region35: #{tpu_custom_call.1} parent=27 // pred_region
          %200 = dma.done %s193, 384
        $region36: #{tpu_custom_call.1} parent=27 // pred_fallthru
          _
        %s201 = sand.u32 %s44, 1
        %s202 = scalar_lea.sflag [#allocation3], %s201
        %s203 = sand.u32 %s44, 1
        %s204 = smul.addr %s203, 24
        %s205 = scalar_lea.vmem [#allocation2], %s204
        %p206 = pneg %p57
        %p207 = pneg %p54
        %s208 = sand.u32 %s72, 1
        %s209 = scalar_lea.sflag [#allocation6], %s208
        %s210 = sand.u32 %s72, 1
        %s211 = smul.addr %s210, 24
        %s212 = scalar_lea.vmem [#allocation5], %s211
        %p213 = pneg %p85
        %p214 = pneg %p82
        %p215 = pneg %p113
        %p216 = pneg %p110
        %s217 = sand.u32 %s100, 1
        %s218 = scalar_lea.sflag [#allocation4], %s217
        %s219 = sand.u32 %s100, 1
        %s220 = smul.addr %s219, 16
        %s221 = scalar_lea.vmem [#allocation7], %s220
        %v222 = vlaneseq
        %v223 = vshrl.u32 %v222, 7
        %v224 = vlaneseq
        %v225 = vand.u32 %v224, 127
        %vm226 = vcmp.lt.s32.totalorder %v223, 7
        %vm227 = vcmp.lt.s32.totalorder %v225, 15
        %v228 = vld [vmem:[%s187] sm:$0xff]
        %v229 = vld [vmem:[%s196] sm:$0xff]
        %v230 = vrot.slane %v228, 1
        %v231 = vrot.slane %v229, 1
        %v232 = vsub.f32 %v230, %v228
        %v233 = vsub.f32 %v231, %v229
        %v234 = vmul.f32 %v232, %v233
        %vm235 = vcmp.le.f32.partialorder %v234, 0.0
        %vm236 = vmand %vm235, %vm226
        %v237 = vsub.f32 %v233, %v232
        %v238 = vand.u32 2147483647, %v237
        %v239 = vsel %vm236, %v238, 0.0
        %vm240 = vcmask 130048
        %v241 = vsel %vm240, %v239, 0.0
        %v242 = vrot.slane %v241, 4
        %v243 = vadd.f32 %v241, %v242
        %v244 = vrot.slane %v243, 2
        %v245 = vadd.f32 %v243, %v244
        %v246 = vrot.slane %v245, 1
        %v247 = vadd.f32 %v245, %v246
        %v248 = vadd.f32 %v247, 0.0
        %v249 = vsel %vm236, 1.0, 0.0
        %v250 = vsel %vm240, %v249, 0.0
        %v251 = vrot.slane %v250, 4
        %v252 = vadd.f32 %v250, %v251
        %v253 = vrot.slane %v252, 2
        %v254 = vadd.f32 %v252, %v253
        %v255 = vrot.slane %v254, 1
        %v256 = vadd.f32 %v254, %v255
        %v257 = vadd.f32 %v256, 0.0
        %vm258 = vcmask 1047680
        %259 = vrot.lane.b32.xlu0 %v228, 16
        %v260 = vpop.permute.xlu0 %259
        %v261 = vsel %vm258, %v260, %v228
        %262 = vrot.lane.b32.xlu0 %v261, 16
        %v263 = vpop.permute.xlu0 %262
        %v264 = vsel %vm258, %v263, %v228
        %265 = vrot.lane.b32.xlu0 %v229, 16
        %v266 = vpop.permute.xlu0 %265
        %v267 = vsel %vm258, %v266, %v229
        %268 = vrot.lane.b32.xlu0 %v267, 16
        %v269 = vpop.permute.xlu0 %268
        %v270 = vsel %vm258, %v269, %v229
        %272 = vrot.lane.b32.xlu0 %v228, 1
        %v273 = vpop.permute.xlu0 %272
        %v275 = vsub.f32 %v264, %v273
        %277 = vrot.lane.b32.xlu0 %v229, 1
        %v278 = vpop.permute.xlu0 %277
        %v280 = vsub.f32 %v270, %v278
        %v281 = vmul.f32 %v275, %v280
        %vm282 = vcmp.le.f32.partialorder %v281, 0.0
        %v283 = vsel %vm227, 1, 0
        %284 = vrot.lane.b32.xlu0 %v283, 1
        %v285 = vpop.permute.xlu0 %284
        %vm286 = vcmp.ne.s32.totalorder %v285, 0
        %vm287 = vmand %vm282, %vm286
        %v288 = vsub.f32 %v280, %v275
        %v289 = vand.u32 2147483647, %v288
        %v290 = vsel %vm287, %v289, 0.0
        %vm291 = vcmask 138248
        %v292 = vsel %vm291, %v290, 0.0
        %v293 = vrot.slane %v292, 4
        %v294 = vadd.f32 %v292, %v293
        %v295 = vrot.slane %v294, 2
        %v296 = vadd.f32 %v294, %v295
        %v297 = vrot.slane %v296, 1
        %v298 = vadd.f32 %v296, %v297
        %v299 = vadd.f32 %v298, 0.0
        %v300 = vsel %vm287, 1.0, 0.0
        %v301 = vsel %vm291, %v300, 0.0
        %v302 = vrot.slane %v301, 4
        %v303 = vadd.f32 %v301, %v302
        %v304 = vrot.slane %v303, 2
        %v305 = vadd.f32 %v303, %v304
        %v306 = vrot.slane %v305, 1
        %v307 = vadd.f32 %v305, %v306
        %v308 = vadd.f32 %v307, 0.0
        %s309 = scalar_lea.vmem %s187, 8 [#allocation2]
        %v310 = vld [vmem:[%s309] sm:$0xff]
        %s311 = scalar_lea.vmem %s196, 8 [#allocation5]
        %v312 = vld [vmem:[%s311] sm:$0xff]
        %v313 = vrot.slane %v310, 1
        %v314 = vrot.slane %v312, 1
        %v315 = vsub.f32 %v313, %v310
        %v316 = vsub.f32 %v314, %v312
        %v317 = vmul.f32 %v315, %v316
        %vm318 = vcmp.le.f32.partialorder %v317, 0.0
        %vm319 = vmand %vm318, %vm226
        %v320 = vsub.f32 %v316, %v315
        %v321 = vand.u32 2147483647, %v320
        %v322 = vsel %vm319, %v321, 0.0
        %v323 = vsel %vm240, %v322, 0.0
        %v324 = vrot.slane %v323, 4
        %v325 = vadd.f32 %v323, %v324
        %v326 = vrot.slane %v325, 2
        %v327 = vadd.f32 %v325, %v326
        %v328 = vrot.slane %v327, 1
        %v329 = vadd.f32 %v327, %v328
        %v330 = vadd.f32 %v248, %v329
        %v331 = vsel %vm319, 1.0, 0.0
        %v332 = vsel %vm240, %v331, 0.0
        %v333 = vrot.slane %v332, 4
        %v334 = vadd.f32 %v332, %v333
        %v335 = vrot.slane %v334, 2
        %v336 = vadd.f32 %v334, %v335
        %v337 = vrot.slane %v336, 1
        %v338 = vadd.f32 %v336, %v337
        %v339 = vadd.f32 %v257, %v338
        %340 = vrot.lane.b32.xlu0 %v310, 16
        %v341 = vpop.permute.xlu0 %340
        %v342 = vsel %vm258, %v341, %v310
        %343 = vrot.lane.b32.xlu0 %v342, 16
        %v344 = vpop.permute.xlu0 %343
        %v345 = vsel %vm258, %v344, %v310
        %346 = vrot.lane.b32.xlu0 %v312, 16
        %v347 = vpop.permute.xlu0 %346
        %v348 = vsel %vm258, %v347, %v312
        %349 = vrot.lane.b32.xlu0 %v348, 16
        %v350 = vpop.permute.xlu0 %349
        %v351 = vsel %vm258, %v350, %v312
        %353 = vrot.lane.b32.xlu0 %v310, 1
        %v354 = vpop.permute.xlu0 %353
        %v356 = vsub.f32 %v345, %v354
        %358 = vrot.lane.b32.xlu0 %v312, 1
        %v359 = vpop.permute.xlu0 %358
        %v361 = vsub.f32 %v351, %v359
        %v362 = vmul.f32 %v356, %v361
        %vm363 = vcmp.le.f32.partialorder %v362, 0.0
        %vm364 = vmand %vm363, %vm286
        %v365 = vsub.f32 %v361, %v356
        %v366 = vand.u32 2147483647, %v365
        %v367 = vsel %vm364, %v366, 0.0
        %v368 = vsel %vm291, %v367, 0.0
        %v369 = vrot.slane %v368, 4
        %v370 = vadd.f32 %v368, %v369
        %v371 = vrot.slane %v370, 2
        %v372 = vadd.f32 %v370, %v371
        %v373 = vrot.slane %v372, 1
        %v374 = vadd.f32 %v372, %v373
        %v375 = vadd.f32 %v299, %v374
        %v376 = vsel %vm364, 1.0, 0.0
        %v377 = vsel %vm291, %v376, 0.0
        %v378 = vrot.slane %v377, 4
        %v379 = vadd.f32 %v377, %v378
        %v380 = vrot.slane %v379, 2
        %v381 = vadd.f32 %v379, %v380
        %v382 = vrot.slane %v381, 1
        %v383 = vadd.f32 %v381, %v382
        %v384 = vadd.f32 %v308, %v383
        %s385 = scalar_lea.vmem %s187, 16 [#allocation2]
        %v386 = vld [vmem:[%s385] sm:$0xff]
        %s387 = scalar_lea.vmem %s196, 16 [#allocation5]
        %v388 = vld [vmem:[%s387] sm:$0xff]
        %v389 = vrot.slane %v386, 1
        %v390 = vrot.slane %v388, 1
        %v391 = vsub.f32 %v389, %v386
        %v392 = vsub.f32 %v390, %v388
        %v393 = vmul.f32 %v391, %v392
        %vm394 = vcmp.le.f32.partialorder %v393, 0.0
        %vm395 = vmand %vm394, %vm226
        %v396 = vsub.f32 %v392, %v391
        %v397 = vand.u32 2147483647, %v396
        %v398 = vsel %vm395, %v397, 0.0
        %v399 = vsel %vm240, %v398, 0.0
        %v400 = vrot.slane %v399, 4
        %v401 = vadd.f32 %v399, %v400
        %v402 = vrot.slane %v401, 2
        %v403 = vadd.f32 %v401, %v402
        %v404 = vrot.slane %v403, 1
        %v405 = vadd.f32 %v403, %v404
        %v406 = vadd.f32 %v330, %v405
        %v407 = vsel %vm395, 1.0, 0.0
        %v408 = vsel %vm240, %v407, 0.0
        %v409 = vrot.slane %v408, 4
        %v410 = vadd.f32 %v408, %v409
        %v411 = vrot.slane %v410, 2
        %v412 = vadd.f32 %v410, %v411
        %v413 = vrot.slane %v412, 1
        %v414 = vadd.f32 %v412, %v413
        %v415 = vadd.f32 %v339, %v414
        %416 = vrot.lane.b32.xlu0 %v386, 16
        %v417 = vpop.permute.xlu0 %416
        %v418 = vsel %vm258, %v417, %v386
        %419 = vrot.lane.b32.xlu0 %v418, 16
        %v420 = vpop.permute.xlu0 %419
        %v421 = vsel %vm258, %v420, %v386
        %422 = vrot.lane.b32.xlu0 %v388, 16
        %v423 = vpop.permute.xlu0 %422
        %v424 = vsel %vm258, %v423, %v388
        %425 = vrot.lane.b32.xlu0 %v424, 16
        %v426 = vpop.permute.xlu0 %425
        %v427 = vsel %vm258, %v426, %v388
        %429 = vrot.lane.b32.xlu0 %v386, 1
        %v430 = vpop.permute.xlu0 %429
        %v432 = vsub.f32 %v421, %v430
        %434 = vrot.lane.b32.xlu0 %v388, 1
        %v435 = vpop.permute.xlu0 %434
        %v437 = vsub.f32 %v427, %v435
        %v438 = vmul.f32 %v432, %v437
        %vm439 = vcmp.le.f32.partialorder %v438, 0.0
        %vm440 = vmand %vm439, %vm286
        %v441 = vsub.f32 %v437, %v432
        %v442 = vand.u32 2147483647, %v441
        %v443 = vsel %vm440, %v442, 0.0
        %v444 = vsel %vm291, %v443, 0.0
        %v445 = vrot.slane %v444, 4
        %v446 = vadd.f32 %v444, %v445
        %v447 = vrot.slane %v446, 2
        %v448 = vadd.f32 %v446, %v447
        %v449 = vrot.slane %v448, 1
        %v450 = vadd.f32 %v448, %v449
        %v451 = vadd.f32 %v375, %v450
        %v452 = vsel %vm440, 1.0, 0.0
        %v453 = vsel %vm291, %v452, 0.0
        %v454 = vrot.slane %v453, 4
        %v455 = vadd.f32 %v453, %v454
        %v456 = vrot.slane %v455, 2
        %v457 = vadd.f32 %v455, %v456
        %v458 = vrot.slane %v457, 1
        %v459 = vadd.f32 %v457, %v458
        %v460 = vadd.f32 %v384, %v459
        %v461 = vsub.f32 %v228, %v310
        %v462 = vsub.f32 %v228, %v386
        %v463 = vsub.f32 %v310, %v386
        %v464 = vsub.f32 %v229, %v312
        %v465 = vsub.f32 %v229, %v388
        %v466 = vsub.f32 %v312, %v388
        %v467 = vmul.f32 %v461, %v464
        %vm468 = vcmp.le.f32.partialorder %v467, 0.0
        %v469 = vmul.f32 %v462, %v465
        %vm470 = vcmp.le.f32.partialorder %v469, 0.0
        %v471 = vmul.f32 %v463, %v463
        %vm472 = vcmp.le.f32.partialorder %v471, 0.0
        %v473 = vsub.f32 %v464, %v461
        %v474 = vand.u32 2147483647, %v473
        %v475 = vsel %vm468, %v474, 0.0
        %v476 = vsel %vm240, %v475, 0.0
        %v477 = vrot.slane %v476, 4
        %v478 = vadd.f32 %v476, %v477
        %v479 = vrot.slane %v478, 2
        %v480 = vadd.f32 %v478, %v479
        %v481 = vrot.slane %v480, 1
        %v482 = vadd.f32 %v480, %v481
        %v483 = vsel %vm468, 1.0, 0.0
        %v484 = vsel %vm240, %v483, 0.0
        %v485 = vrot.slane %v484, 4
        %v486 = vadd.f32 %v484, %v485
        %v487 = vrot.slane %v486, 2
        %v488 = vadd.f32 %v486, %v487
        %v489 = vrot.slane %v488, 1
        %v490 = vadd.f32 %v488, %v489
        %v491 = vsub.f32 %v465, %v462
        %v492 = vand.u32 2147483647, %v491
        %v493 = vsel %vm470, %v492, 0.0
        %v494 = vsel %vm240, %v493, 0.0
        %v495 = vrot.slane %v494, 4
        %v496 = vadd.f32 %v494, %v495
        %v497 = vrot.slane %v496, 2
        %v498 = vadd.f32 %v496, %v497
        %v499 = vrot.slane %v498, 1
        %v500 = vadd.f32 %v498, %v499
        %v501 = vsel %vm470, 1.0, 0.0
        %v502 = vsel %vm240, %v501, 0.0
        %v503 = vrot.slane %v502, 4
        %v504 = vadd.f32 %v502, %v503
        %v505 = vrot.slane %v504, 2
        %v506 = vadd.f32 %v504, %v505
        %v507 = vrot.slane %v506, 1
        %v508 = vadd.f32 %v506, %v507
        %v509 = vsub.f32 %v466, %v463
        %v510 = vand.u32 2147483647, %v509
        %v511 = vsel %vm472, %v510, 0.0
        %v512 = vsel %vm240, %v511, 0.0
        %v513 = vrot.slane %v512, 4
        %v514 = vadd.f32 %v512, %v513
        %v515 = vrot.slane %v514, 2
        %v516 = vadd.f32 %v514, %v515
        %v517 = vrot.slane %v516, 1
        %v518 = vadd.f32 %v516, %v517
        %v519 = vsel %vm472, 1.0, 0.0
        %v520 = vsel %vm240, %v519, 0.0
        %v521 = vrot.slane %v520, 4
        %v522 = vadd.f32 %v520, %v521
        %v523 = vrot.slane %v522, 2
        %v524 = vadd.f32 %v522, %v523
        %v525 = vrot.slane %v524, 1
        %v526 = vadd.f32 %v524, %v525
        %528 = vrot.lane.b32.xlu0 %v451, 127
        %v529 = vpop.permute.xlu0 %528
        %532 = vrot.lane.b32.xlu0 %v460, 127
        %v533 = vpop.permute.xlu0 %532
        %vm535 = vcmask 1040384
        %v536 = vsel %vm535, %v406, %v415
        %vm537 = vcmask 1041408
        %v538 = vsel %vm537, %v536, %v529
        %vm539 = vcmask 1042432
        %v540 = vsel %vm539, %v538, %v533
        %vm541 = vcmask 1043456
        %v542 = vsel %vm541, %v540, %v482
        %vm543 = vcmask 1044480
        %v544 = vsel %vm543, %v542, %v490
        %vm545 = vcmask 1045504
        %v546 = vsel %vm545, %v544, %v500
        %vm547 = vcmask 1046528
        %v548 = vsel %vm547, %v546, %v508
        %v549 = vsel %vm535, %v518, %v526
        %v550 = vsel %vm537, %v549, 0.0
        %551 = vst.msk [vmem:[%s221] sm:$0xff] %vm240, %v548
        %552 = vst.msk [vmem:[%s221 + $0x8] sm:$0xff] %vm240, %v550
        %s553 = sand.u32 %s100, 1
        %s554 = scalar_lea.sflag [#allocation4], %s553
        %s555 = sand.u32 %s100, 1
        %s556 = smul.addr %s555, 16
        %s557 = scalar_lea.vmem [#allocation7], %s556
        // Predicated region
        $region37: #{tpu_custom_call.1} parent=27 // pred_check
          %p558 = pneg %p110
        $region38: #{tpu_custom_call.1} parent=27 // pred_check_branch
          %560 = sbr.rel (%p558) target = $region40
        $region39: #{tpu_custom_call.1} parent=27 // pred_region
          %s562 = ssub.s32 256, 256
          %563 = vsyncadd %s554, %s562
          %s564 = smul.addr %s27, 2
          %s565 = smul.addr %s26, 4
          %s566 = sadd.s32 %s564, %s565
          %s567 = smul.addr %s566, 128
          %s568 = scalar_lea.hbm %s2, %s567
          %s569 = sshll.u32 %s557, 4
          %s570 = int_to_ptr.vmem [resolvable:$true] %s569
          %575 = dma.vmem_to_hbm [thread:$0]  %s570, 256, %s568, %s554, 128, 128, 8
        $region40: #{tpu_custom_call.1} parent=27 // pred_fallthru
          _
      $region28: #{tpu_custom_call.1} parent=5 // pred_fallthru
        _
      %p576 = scmp.le.s32.totalorder 2, %s17
      // Predicated region
      $region41: #{tpu_custom_call.1} parent=5 // pred_check
        %p577 = pneg %p576
      $region42: #{tpu_custom_call.1} parent=5 // pred_check_branch
        %579 = sbr.rel (%p577) target = $region44
      $region43: #{tpu_custom_call.1} parent=5 // pred_region
        %s580 = ssub.s32 %s17, 2
        // Predicated region
        $region45: #{tpu_custom_call.1} parent=43 // pred_check
          %p581 = pneg %p116
        $region46: #{tpu_custom_call.1} parent=43 // pred_check_branch
          %583 = sbr.rel (%p581) target = $region48
        $region47: #{tpu_custom_call.1} parent=43 // pred_region
          %s584 = sand.u32 %s101, 1
          %s585 = scalar_lea.sflag [#allocation4], %s584
          %s586 = sand.u32 %s101, 1
          %s587 = smul.addr %s586, 16
          %s588 = scalar_lea.vmem [#allocation7], %s587
          %589 = dma.done %s585, 256
        $region48: #{tpu_custom_call.1} parent=43 // pred_fallthru
          _
      $region44: #{tpu_custom_call.1} parent=5 // pred_fallthru
        _
    $region6: #{tpu_custom_call.1} parent=1 // loop_footer
      %s21 = sadd.s32 1, %s17
    $region7: #{tpu_custom_call.1} parent=1 // loop_footer_branch
      %16 = sbr.rel target = $region3
    $region8: #{tpu_custom_call.1} parent=1 // loop_exit
      _
    %590 = vsyncpa [#allocation3], 1
    %s591 = scalar_lea.sflag [#allocation3], 1
    %592 = vsyncpa %s591, 1
    %593 = vsyncpa [#allocation6], 1
    %s594 = scalar_lea.sflag [#allocation6], 1
    %595 = vsyncpa %s594, 1
    %596 = vsyncpa [#allocation4], 1
    %s597 = scalar_lea.sflag [#allocation4], 1
    %598 = vsyncpa %s597, 1

</llo_original>
